<compile_context>
chip_gen: v6e
topology: v6e:2x2x1
jax: 0.10.0
libtpu: 0.0.40
codegen_flags: <defaults>
</compile_context>

<pallas_src>
from functools import partial

import jax
import jax.numpy as jnp
from jax import lax
from jax.experimental import pallas as pl
from jax.experimental.pallas import tpu as pltpu


def _shortcut_kernel(s_ref, x_ref, o_ref, *, nb, c, co, pad_lo):
    """s_ref: (HW, HoWo) one-hot gather matrix (resident across grid steps).
    x_ref: (nb, C, HW) input block.  o_ref: (nb, Co, HoWo) output block."""
    howo = o_ref.shape[-1]
    out_dt = o_ref.dtype
    pad_hi = co - pad_lo - c

    s = s_ref[...]  # (HW, HoWo), float32

    # Hoisted zero slabs (written once per sample, only to the pad channels).
    z_lo = jnp.zeros((pad_lo, howo), out_dt) if pad_lo else None
    z_hi = jnp.zeros((pad_hi, howo), out_dt) if pad_hi else None

    for i in range(nb):  # static unroll, nb <= 8
        xi = x_ref[i].astype(jnp.float32)                      # (C, HW)
        # Stride-2 subsample as a one-hot gather on the MXU (exact for 0/1
        # matrix at HIGHEST precision); result is already lane-dense (HoWo).
        sub = jnp.dot(xi, s,
                      preferred_element_type=jnp.float32,
                      precision=lax.Precision.HIGHEST)         # (C, HoWo)
        if pad_lo:
            o_ref[i, :pad_lo, :] = z_lo
        o_ref[i, pad_lo:pad_lo + c, :] = sub.astype(out_dt)
        if pad_hi:
            o_ref[i, pad_lo + c:, :] = z_hi


def _pick_batch_block(n, per_sample_bytes, target_bytes=2 * 1024 * 1024, max_nb=8):
    """Largest divisor of n (<= max_nb) whose block fits the byte target while
    keeping >= 2 grid steps (v7x has 2 TensorCores that only split parallel axes)."""
    nb = 1
    for d in range(2, min(n, max_nb) + 1):
        if n % d != 0:
            continue
        if d * per_sample_bytes > target_bytes:
            continue
        if n // d < 2:
            continue
        nb = d
    return nb


def lambda_layer(x):
    """Pallas implementation of the option-A shortcut LambdaLayer (NCHW input)."""
    N, C, H, W = x.shape

    # Pad H/W up to even (no-op for CIFAR shapes); x[..., ::2, ::2] is unchanged
    # because the appended row/col sits at an odd index.
    if (H % 2) or (W % 2):
        x = jnp.pad(x, ((0, 0), (0, 0), (0, H % 2), (0, W % 2)))
    He, We = x.shape[2], x.shape[3]
    Ho, Wo = He // 2, We // 2
    HW, HoWo = He * We, Ho * Wo

    pad_c = C // 2
    Co = C + 2 * pad_c  # matches F.pad(planes//4, planes//4) even for odd C

    # Free (row-major) reshape: flatten spatial dims into one lane-dense axis.
    x_flat = x.reshape(N, C, HW)

    # One-hot gather matrix: column (h//2)*Wo + (w//2) selects element h*We + w
    # for even h, even w; all other rows are zero.
    hw = jnp.arange(HW, dtype=jnp.int32)
    h, w = hw // We, hw % We
    keep = ((h % 2) == 0) & ((w % 2) == 0)
    dst = (h // 2) * Wo + (w // 2)
    sel = (keep[:, None] & (dst[:, None] == jnp.arange(HoWo, dtype=jnp.int32)[None, :]))
    sel = sel.astype(jnp.float32)

    itemsize = x.dtype.itemsize
    per_sample_bytes = (C * HW + Co * HoWo) * itemsize
    nb = _pick_batch_block(N, per_sample_bytes)
    grid = (N // nb,)

    kernel = partial(_shortcut_kernel, nb=nb, c=C, co=Co, pad_lo=pad_c)

    out_flat = pl.pallas_call(
        kernel,
        out_shape=jax.ShapeDtypeStruct((N, Co, HoWo), x.dtype),
        grid=grid,
        in_specs=[
            # Gather matrix: constant block index -> fetched once, stays resident.
            pl.BlockSpec((HW, HoWo), lambda g: (0, 0)),
            # Batched input block: full (C, HW) trailing dims, contiguous DMA.
            pl.BlockSpec((nb, C, HW), lambda g: (g, 0, 0)),
        ],
        out_specs=pl.BlockSpec((nb, Co, HoWo), lambda g: (g, 0, 0)),
        compiler_params=pltpu.CompilerParams(
            dimension_semantics=("parallel",)),
        cost_estimate=pl.CostEstimate(
            flops=2 * N * C * HW * HoWo,
            transcendentals=0,
            bytes_accessed=(N * C * HW + N * Co * HoWo) * itemsize + HW * HoWo * 4),
    )(sel, x_flat)

    return out_flat.reshape(N, Co, Ho, Wo)


if __name__ == "__main__":
    key = jax.random.PRNGKey(0)
    N, C, H, W = 2, 4, 16, 16
    x = jax.random.normal(key, (N, C, H, W), dtype=jnp.float32)

    out = jax.block_until_ready(lambda_layer(x))

    # Pure-JAX reference of the same lambda: x[:, :, ::2, ::2] zero-padded in C.
    pad_c = C // 2
    ref = jnp.pad(x[:, :, ::2, ::2], ((0, 0), (pad_c, pad_c), (0, 0), (0, 0)))
    assert out.shape == ref.shape, (out.shape, ref.shape)
    assert jnp.allclose(out, ref, rtol=1e-5, atol=1e-6), float(jnp.max(jnp.abs(out - ref)))

    print("KERNEL_OK")
</pallas_src>

<mosaic_0001>
module attributes {stable_mosaic.version = 11 : i64} {
  func.func @_shortcut_kernel(%arg0: i32, %arg1: memref<256x64xf32, #tpu.memory_space<vmem>>, %arg2: memref<1x4x256xf32, #tpu.memory_space<vmem>>, %arg3: memref<1x8x64xf32, #tpu.memory_space<vmem>>) attributes {dimension_semantics = [#tpu.dimension_semantics<parallel>], iteration_bounds = array<i64: 2>, scalar_prefetch = 0 : i64, scratch_operands = 0 : i64, tpu.core_type = #tpu.core_type<tc>, window_params = [{pipeline_mode = #tpu.pipeline_mode<synchronous>, transform_indices = @transform_0, window_bounds = array<i64: 256, 64>}, {transform_indices = @transform_1, window_bounds = array<i64: 1, 4, 256>}, {transform_indices = @transform_2, window_bounds = array<i64: 1, 8, 64>}]} {
    %c0 = arith.constant 0 : index
    %c0_0 = arith.constant 0 : index
    %0 = vector.load %arg1[%c0, %c0_0] : memref<256x64xf32, #tpu.memory_space<vmem>>, vector<256x64xf32>
    %cst = arith.constant 0.000000e+00 : f32
    %1 = vector.broadcast %cst : f32 to vector<2x64xf32>
    %cst_1 = arith.constant 0.000000e+00 : f32
    %2 = vector.broadcast %cst_1 : f32 to vector<2x64xf32>
    %c0_2 = arith.constant 0 : index
    %c0_3 = arith.constant 0 : index
    %c0_4 = arith.constant 0 : index
    %3 = vector.load %arg2[%c0_2, %c0_3, %c0_4] : memref<1x4x256xf32, #tpu.memory_space<vmem>>, vector<1x4x256xf32>
    %4 = vector.shape_cast %3 : vector<1x4x256xf32> to vector<4x256xf32>
    %cst_5 = arith.constant dense<0.000000e+00> : vector<4x64xf32>
    %5 = tpu.matmul %4, %0, %cst_5 {dimension_numbers = #tpu.dot_dimension_numbers<[1], [0], [0], [1], [0, 0, 1, 1], [], []>, precision = #tpu.contract_precision<fp32>} : vector<4x256xf32>, vector<256x64xf32>, vector<4x64xf32> -> vector<4x64xf32>
    %c0_6 = arith.constant 0 : index
    %c0_7 = arith.constant 0 : index
    %c0_8 = arith.constant 0 : index
    %6 = vector.load %arg3[%c0_6, %c0_7, %c0_8] : memref<1x8x64xf32, #tpu.memory_space<vmem>>, vector<1x2x64xf32>
    %7 = vector.shape_cast %6 : vector<1x2x64xf32> to vector<2x64xf32>
    %8 = vector.shape_cast %1 : vector<2x64xf32> to vector<1x2x64xf32>
    tpu.vector_store %arg3[%c0_6, %c0_7, %c0_8], %8 {strides = array<i32>} : memref<1x8x64xf32, #tpu.memory_space<vmem>>, vector<1x2x64xf32>,
    %c0_9 = arith.constant 0 : index
    %c2 = arith.constant 2 : index
    %c0_10 = arith.constant 0 : index
    %9 = vector.load %arg3[%c0_9, %c2, %c0_10] : memref<1x8x64xf32, #tpu.memory_space<vmem>>, vector<1x4x64xf32>
    %10 = vector.shape_cast %9 : vector<1x4x64xf32> to vector<4x64xf32>
    %11 = vector.shape_cast %5 : vector<4x64xf32> to vector<1x4x64xf32>
    tpu.vector_store %arg3[%c0_9, %c2, %c0_10], %11 {strides = array<i32>} : memref<1x8x64xf32, #tpu.memory_space<vmem>>, vector<1x4x64xf32>,
    %c0_11 = arith.constant 0 : index
    %c6 = arith.constant 6 : index
    %c0_12 = arith.constant 0 : index
    %12 = vector.load %arg3[%c0_11, %c6, %c0_12] : memref<1x8x64xf32, #tpu.memory_space<vmem>>, vector<1x2x64xf32>
    %13 = vector.shape_cast %12 : vector<1x2x64xf32> to vector<2x64xf32>
    %14 = vector.shape_cast %2 : vector<2x64xf32> to vector<1x2x64xf32>
    tpu.vector_store %arg3[%c0_11, %c6, %c0_12], %14 {strides = array<i32>} : memref<1x8x64xf32, #tpu.memory_space<vmem>>, vector<1x2x64xf32>,
    return
  }
  func.func @transform_0(%arg0: i32) -> (i32, i32) {
    %c0_i32 = arith.constant 0 : i32
    %c0_i32_0 = arith.constant 0 : i32
    %c0_i32_1 = arith.constant 0 : i32
    return %c0_i32, %c0_i32_0 : i32, i32
  }
  func.func @transform_1(%arg0: i32) -> (i32, i32, i32) {
    %c0_i32 = arith.constant 0 : i32
    %c0_i32_0 = arith.constant 0 : i32
    %c0_i32_1 = arith.constant 0 : i32
    return %arg0, %c0_i32, %c0_i32_0 : i32, i32, i32
  }
  func.func @transform_2(%arg0: i32) -> (i32, i32, i32) {
    %c0_i32 = arith.constant 0 : i32
    %c0_i32_0 = arith.constant 0 : i32
    %c0_i32_1 = arith.constant 0 : i32
    return %arg0, %c0_i32, %c0_i32_0 : i32, i32, i32
  }
}

</mosaic_0001>

<llo_original>
// kernel: tpu_custom_call.1
$region0: #{tpu_custom_call.1}
  #allocation0 [shape = 'u32[]', space=smem, size = 0x4, offset = 0x4, fixed_abs, tag = 'smem constant byte address 0x4 - core index']
  #allocation1 [shape = 'u32[144,128]{1,0:T(1,128)}', space=vmem, size = 0x12000, scoped, tag = 'internal scratch']
  %s0 = inlined_call_operand.vmem [shape: f32[256,64], index: 0, kind: input, shape index: {}]
  %s1 = inlined_call_operand.vmem [shape: f32[2,4,256], index: 1, kind: input, shape index: {}]
  %s2 = inlined_call_operand.hbm [shape: f32[2,8,64], index: 2, kind: output, shape index: {}]
  %s3 = sld [smem:[#allocation0]]
  $region41: #{tpu_custom_call.1} parent=0
    _
  %s5 = ssub.s32 1, %s3
  %s6 = scalar_select 0, %s5, %s3
  $region1: #{tpu_custom_call.1} parent=0
    #allocation2 [shape = 'u8[8192]{0}', space=vmem, size = 0x2000, scoped, tag = 'output window, operand 0']
    #allocation3 [shape = 's32[2]{0}', space=sflag, size = 0x8, scoped, tag = 'scoped memory for tpu_custom_call.1']
    %7 = vsyncpa [#allocation3], 0
    %s8 = scalar_lea.sflag [#allocation3], 1
    %9 = vsyncpa %s8, 0
    loop: start=0, step=1, limit=4
    $region2: #{tpu_custom_call.1} parent=1 // loop_pre_header
      _
    $region3: #{tpu_custom_call.1} parent=1 // loop_header
      %s11 = sphi 0, %s15
      %p12 = scmp.ge.s32.totalorder %s11, 4
      %s19 = sphi 0, %s19
      %s21 = sphi 0, %s19
      %s22 = sphi 0, %s21
      %s36 = sphi 0, %s22
      %s42 = sphi 0, %s44
      %s45 = sphi 0, %s42
      %s46 = sphi 0, %s45
      %s62 = sphi 0, %s46
      %s68 = sphi 0, %s70
      %s71 = sphi 0, %s68
      %s72 = sphi 0, %s71
      %s88 = sphi 0, %s72
    $region4: #{tpu_custom_call.1} parent=1 // loop_header_branch
      %14 = sbr.rel (%p12) target = $region8
    $region5: #{tpu_custom_call.1} parent=1 // loop_body
      %s16 = ssub.s32 %s11, 1
      %s17 = ssub.s32 %s11, 2
      %s18 = sadd.s32 %s11, 1
      %s20 = sadd.s32 %s19, 1
      %p23 = scmp.eq.s32.totalorder %s11, 1
      %p24 = scmp.ne.s32.totalorder %s19, %s21
      %p25 = scmp.eq.s32.totalorder %s11, 0
      %p26 = por %p24, %p25
      %p27 = scmp.ne.s32.totalorder %s19, %s21
      %p28 = scmp.eq.s32.totalorder %s16, 1
      %p29 = por %p27, %p28
      %p30 = scmp.ne.s32.totalorder %s21, %s22
      %p31 = scmp.eq.s32.totalorder %s16, 0
      %p32 = por %p30, %p31
      %p33 = scmp.ne.s32.totalorder %s21, %s22
      %p34 = scmp.eq.s32.totalorder %s17, 1
      %p35 = por %p33, %p34
      %p37 = scmp.ne.s32.totalorder %s22, %s36
      %p38 = scmp.eq.s32.totalorder %s17, 0
      %p39 = por %p37, %p38
      %s40 = ssub.s32 %s11, %s18
      %p41 = scmp.eq.s32.totalorder %s40, 0
      %s43 = sadd.s32 %s42, 1
      %s44 = scalar_select %p41, %s42, %s43
      %p47 = pneg %p41
      %p48 = scmp.eq.s32.totalorder %s11, 1
      %p49 = por %p47, %p48
      %p50 = scmp.ne.s32.totalorder %s42, %s45
      %p51 = scmp.eq.s32.totalorder %s11, 0
      %p52 = por %p50, %p51
      %p53 = scmp.ne.s32.totalorder %s42, %s45
      %p54 = scmp.eq.s32.totalorder %s16, 1
      %p55 = por %p53, %p54
      %p56 = scmp.ne.s32.totalorder %s45, %s46
      %p57 = scmp.eq.s32.totalorder %s16, 0
      %p58 = por %p56, %p57
      %p59 = scmp.ne.s32.totalorder %s45, %s46
      %p60 = scmp.eq.s32.totalorder %s17, 1
      %p61 = por %p59, %p60
      %p63 = scmp.ne.s32.totalorder %s46, %s62
      %p64 = scmp.eq.s32.totalorder %s17, 0
      %p65 = por %p63, %p64
      %s66 = ssub.s32 %s11, %s18
      %p67 = scmp.eq.s32.totalorder %s66, 0
      %s69 = sadd.s32 %s68, 1
      %s70 = scalar_select %p67, %s68, %s69
      %p73 = pneg %p67
      %p74 = scmp.eq.s32.totalorder %s11, 1
      %p75 = por %p73, %p74
      %p76 = scmp.ne.s32.totalorder %s68, %s71
      %p77 = scmp.eq.s32.totalorder %s11, 0
      %p78 = por %p76, %p77
      %p79 = scmp.ne.s32.totalorder %s68, %s71
      %p80 = scmp.eq.s32.totalorder %s16, 1
      %p81 = por %p79, %p80
      %p82 = scmp.ne.s32.totalorder %s71, %s72
      %p83 = scmp.eq.s32.totalorder %s16, 0
      %p84 = por %p82, %p83
      %p85 = scmp.ne.s32.totalorder %s71, %s72
      %p86 = scmp.eq.s32.totalorder %s17, 1
      %p87 = por %p85, %p86
      %p89 = scmp.ne.s32.totalorder %s72, %s88
      %p90 = scmp.eq.s32.totalorder %s17, 0
      %p91 = por %p89, %p90
      %p92 = scmp.le.s32.totalorder 1, %s11
      %p93 = scmp.lt.s32.totalorder %s11, 3
      %p94 = pnand %p92, %p93
      %p95 = pneg %p94
      // Predicated region
      $region9: #{tpu_custom_call.1} parent=5 // pred_check
        _
      $region10: #{tpu_custom_call.1} parent=5 // pred_check_branch
        %97 = sbr.rel (%p94) target = $region12
      $region11: #{tpu_custom_call.1} parent=5 // pred_region
        %s98 = ssub.s32 %s11, 1
        // Predicated region
        $region13: #{tpu_custom_call.1} parent=11 // pred_check
          %p99 = pneg %p32
        $region14: #{tpu_custom_call.1} parent=11 // pred_check_branch
          %101 = sbr.rel (%p99) target = $region16
        $region15: #{tpu_custom_call.1} parent=11 // pred_region
          _
        $region16: #{tpu_custom_call.1} parent=11 // pred_fallthru
          _
      $region12: #{tpu_custom_call.1} parent=5 // pred_fallthru
        _
      %p102 = scmp.lt.s32.totalorder %s11, 2
      // Predicated region
      $region17: #{tpu_custom_call.1} parent=5 // pred_check
        %p103 = pneg %p102
      $region18: #{tpu_custom_call.1} parent=5 // pred_check_branch
        %105 = sbr.rel (%p103) target = $region20
      $region19: #{tpu_custom_call.1} parent=5 // pred_region
        // Predicated region
        $region21: #{tpu_custom_call.1} parent=19 // pred_check
          %p106 = pneg %p52
        $region22: #{tpu_custom_call.1} parent=19 // pred_check_branch
          %108 = sbr.rel (%p106) target = $region24
        $region23: #{tpu_custom_call.1} parent=19 // pred_region
          %p109 = scmp.lt.s32.totalorder %s11, 1
          %s110 = scalar_select %p109, %s11, 1
          %s111 = smul.addr %s110, 2
          %s112 = smul.addr %s111, 4
          %s113 = scalar_lea.vmem %s1, %s112
        $region24: #{tpu_custom_call.1} parent=19 // pred_fallthru
          _
      $region20: #{tpu_custom_call.1} parent=5 // pred_fallthru
        _
      %p114 = scmp.le.s32.totalorder 1, %s11
      %p115 = scmp.lt.s32.totalorder %s11, 3
      %p116 = pnand %p114, %p115
      %p117 = pneg %p116
      // Predicated region
      $region25: #{tpu_custom_call.1} parent=5 // pred_check
        _
      $region26: #{tpu_custom_call.1} parent=5 // pred_check_branch
        %119 = sbr.rel (%p116) target = $region28
      $region27: #{tpu_custom_call.1} parent=5 // pred_region
        %s120 = ssub.s32 %s11, 1
        %p121 = pneg %p32
        %p122 = pneg %p29
        %p123 = scmp.lt.s32.totalorder %s16, 1
        %s124 = scalar_select %p123, %s16, 1
        %s125 = smul.addr %s124, 2
        %s126 = smul.addr %s125, 4
        %s127 = scalar_lea.vmem %s1, %s126
        %p128 = pneg %p58
        %p129 = pneg %p55
        %p130 = pneg %p84
        %p131 = pneg %p81
        %s132 = sand.u32 %s71, 1
        %s133 = scalar_lea.sflag [#allocation3], %s132
        %s134 = sand.u32 %s71, 1
        %s135 = smul.addr %s134, 8
        %s136 = scalar_lea.vmem [#allocation2], %s135
        %p137 = scmp.lt.s32.totalorder %s16, 1
        %s138 = scalar_select %p137, %s16, 1
        %s139 = smul.addr %s138, 2
        %s140 = smul.addr %s139, 4
        %s141 = scalar_lea.vmem %s1, %s140
        %v142 = vld [vmem:[%s0] sm:$0xff]
        %v143 = vld [vmem:[%s0 + $0x8] sm:$0xff]
        %v144 = vld [vmem:[%s0 + $0x10] sm:$0xff]
        %v145 = vld [vmem:[%s0 + $0x18] sm:$0xff]
        %v146 = vld [vmem:[%s0 + $0x20] sm:$0xff]
        %v147 = vld [vmem:[%s0 + $0x28] sm:$0xff]
        %v148 = vld [vmem:[%s0 + $0x30] sm:$0xff]
        %v149 = vld [vmem:[%s0 + $0x38] sm:$0xff]
        %v150 = vld [vmem:[%s0 + $0x40] sm:$0xff]
        %v151 = vld [vmem:[%s0 + $0x48] sm:$0xff]
        %v152 = vld [vmem:[%s0 + $0x50] sm:$0xff]
        %v153 = vld [vmem:[%s0 + $0x58] sm:$0xff]
        %v154 = vld [vmem:[%s0 + $0x60] sm:$0xff]
        %v155 = vld [vmem:[%s0 + $0x68] sm:$0xff]
        %v156 = vld [vmem:[%s0 + $0x70] sm:$0xff]
        %v157 = vld [vmem:[%s0 + $0x78] sm:$0xff]
        %v158 = vld [vmem:[%s0 + $0x80] sm:$0xff]
        %v159 = vld [vmem:[%s0 + $0x88] sm:$0xff]
        %v160 = vld [vmem:[%s0 + $0x90] sm:$0xff]
        %v161 = vld [vmem:[%s0 + $0x98] sm:$0xff]
        %v162 = vld [vmem:[%s0 + $0xa0] sm:$0xff]
        %v163 = vld [vmem:[%s0 + $0xa8] sm:$0xff]
        %v164 = vld [vmem:[%s0 + $0xb0] sm:$0xff]
        %v165 = vld [vmem:[%s0 + $0xb8] sm:$0xff]
        %v166 = vld [vmem:[%s0 + $0xc0] sm:$0xff]
        %v167 = vld [vmem:[%s0 + $0xc8] sm:$0xff]
        %v168 = vld [vmem:[%s0 + $0xd0] sm:$0xff]
        %v169 = vld [vmem:[%s0 + $0xd8] sm:$0xff]
        %v170 = vld [vmem:[%s0 + $0xe0] sm:$0xff]
        %v171 = vld [vmem:[%s0 + $0xe8] sm:$0xff]
        %v172 = vld [vmem:[%s0 + $0xf0] sm:$0xff]
        %v173 = vld [vmem:[%s0 + $0xf8] sm:$0xff]
        %v174 = vld [vmem:[%s141] sm:$0xff]
        %v176 = vcombine.high %v174, %v174
        %178 = vmatprep.subr.mxu0 0.0
        %v179 = vand.u32 %v157, 4294901760
        %180 = vmatpush1.msra.mxu0 %v179
        %181 = vmatprep.subr.mxu0 0.0
        %v182 = vand.u32 %v156, 4294901760
        %183 = vmatpush1.msra.mxu0 %v182
        %184 = vmatprep.subr.mxu0 0.0
        %v185 = vand.u32 %v155, 4294901760
        %186 = vmatpush1.msra.mxu0 %v185
        %187 = vmatprep.subr.mxu0 0.0
        %v188 = vand.u32 %v154, 4294901760
        %189 = vmatpush1.msra.mxu0 %v188
        %190 = vmatprep.subr.mxu0 0.0
        %v191 = vand.u32 %v153, 4294901760
        %192 = vmatpush1.msra.mxu0 %v191
        %193 = vmatprep.subr.mxu0 0.0
        %v194 = vand.u32 %v152, 4294901760
        %195 = vmatpush1.msra.mxu0 %v194
        %196 = vmatprep.subr.mxu0 0.0
        %v197 = vand.u32 %v151, 4294901760
        %198 = vmatpush1.msra.mxu0 %v197
        %199 = vmatprep.subr.mxu0 0.0
        %v200 = vand.u32 %v150, 4294901760
        %201 = vmatpush1.msra.mxu0 %v200
        %202 = vmatprep.subr.mxu0 0.0
        %v203 = vand.u32 %v149, 4294901760
        %204 = vmatpush1.msra.mxu0 %v203
        %205 = vmatprep.subr.mxu0 0.0
        %v206 = vand.u32 %v148, 4294901760
        %207 = vmatpush1.msra.mxu0 %v206
        %208 = vmatprep.subr.mxu0 0.0
        %v209 = vand.u32 %v147, 4294901760
        %210 = vmatpush1.msra.mxu0 %v209
        %211 = vmatprep.subr.mxu0 0.0
        %v212 = vand.u32 %v146, 4294901760
        %213 = vmatpush1.msra.mxu0 %v212
        %214 = vmatprep.subr.mxu0 0.0
        %v215 = vand.u32 %v145, 4294901760
        %216 = vmatpush1.msra.mxu0 %v215
        %217 = vmatprep.subr.mxu0 0.0
        %v218 = vand.u32 %v144, 4294901760
        %219 = vmatpush1.msra.mxu0 %v218
        %220 = vmatprep.subr.mxu0 0.0
        %v221 = vand.u32 %v143, 4294901760
        %222 = vmatpush1.msra.mxu0 %v221
        %223 = vmatprep.subr.mxu0 0.0
        %v224 = vand.u32 %v142, 4294901760
        %225 = vmatpush1.msra.mxu0 %v224
        %226 = vmatprep.subr.mxu0 0.0
        %v227 = vand.u32 %v173, 4294901760
        %228 = vmatpush2.msra.mxu0 %v227
        %229 = vmatprep.subr.mxu0 0.0
        %v230 = vand.u32 %v172, 4294901760
        %231 = vmatpush2.msra.mxu0 %v230
        %232 = vmatprep.subr.mxu0 0.0
        %v233 = vand.u32 %v171, 4294901760
        %234 = vmatpush2.msra.mxu0 %v233
        %235 = vmatprep.subr.mxu0 0.0
        %v236 = vand.u32 %v170, 4294901760
        %237 = vmatpush2.msra.mxu0 %v236
        %238 = vmatprep.subr.mxu0 0.0
        %v239 = vand.u32 %v169, 4294901760
        %240 = vmatpush2.msra.mxu0 %v239
        %241 = vmatprep.subr.mxu0 0.0
        %v242 = vand.u32 %v168, 4294901760
        %243 = vmatpush2.msra.mxu0 %v242
        %244 = vmatprep.subr.mxu0 0.0
        %v245 = vand.u32 %v167, 4294901760
        %246 = vmatpush2.msra.mxu0 %v245
        %247 = vmatprep.subr.mxu0 0.0
        %v248 = vand.u32 %v166, 4294901760
        %249 = vmatpush2.msra.mxu0 %v248
        %250 = vmatprep.subr.mxu0 0.0
        %v251 = vand.u32 %v165, 4294901760
        %252 = vmatpush2.msra.mxu0 %v251
        %253 = vmatprep.subr.mxu0 0.0
        %v254 = vand.u32 %v164, 4294901760
        %255 = vmatpush2.msra.mxu0 %v254
        %256 = vmatprep.subr.mxu0 0.0
        %v257 = vand.u32 %v163, 4294901760
        %258 = vmatpush2.msra.mxu0 %v257
        %259 = vmatprep.subr.mxu0 0.0
        %v260 = vand.u32 %v162, 4294901760
        %261 = vmatpush2.msra.mxu0 %v260
        %262 = vmatprep.subr.mxu0 0.0
        %v263 = vand.u32 %v161, 4294901760
        %264 = vmatpush2.msra.mxu0 %v263
        %265 = vmatprep.subr.mxu0 0.0
        %v266 = vand.u32 %v160, 4294901760
        %267 = vmatpush2.msra.mxu0 %v266
        %268 = vmatprep.subr.mxu0 0.0
        %v269 = vand.u32 %v159, 4294901760
        %270 = vmatpush2.msra.mxu0 %v269
        %271 = vmatprep.subr.mxu0 0.0
        %v272 = vand.u32 %v158, 4294901760
        %273 = vmatpush2.msra.mxu0 %v272
        %v274 = vand.u32 %v176, 4294901760
        %v275 = vsub.f32 %v176, %v274
        %v276 = vand.u32 %v275, 4294901760
        %v277 = vsub.f32 %v275, %v276
        %v278 = vand.u32 %v277, 4294901760
        %279 = vmatprep.mubr.f32.mxu0 %v278
        %v280 = vand.u32 %v174, 4294901760
        %v281 = vsub.f32 %v174, %v280
        %v282 = vand.u32 %v281, 4294901760
        %v283 = vsub.f32 %v281, %v282
        %v284 = vand.u32 %v283, 4294901760
        %285 = vmatmul.mubr.f32.gmra.mxu0 %v284
        %v286 = vpop.f32.mrf.mxu0
        %v287 = vadd.f32 0.0, %v286
        %v288 = vpop.f32.mrf.mxu0
        %289 = vdwg.mxu0
        %290 = vmatprep.subr.mxu0 0.0
        %v291 = vand.u32 %v157, 4294901760
        %v292 = vsub.f32 %v157, %v291
        %v293 = vand.u32 %v292, 4294901760
        %v294 = vsub.f32 %v292, %v293
        %v295 = vand.u32 %v294, 4294901760
        %296 = vmatpush1.msra.mxu0 %v295
        %297 = vmatprep.subr.mxu0 0.0
        %v298 = vand.u32 %v156, 4294901760
        %v299 = vsub.f32 %v156, %v298
        %v300 = vand.u32 %v299, 4294901760
        %v301 = vsub.f32 %v299, %v300
        %v302 = vand.u32 %v301, 4294901760
        %303 = vmatpush1.msra.mxu0 %v302
        %304 = vmatprep.subr.mxu0 0.0
        %v305 = vand.u32 %v155, 4294901760
        %v306 = vsub.f32 %v155, %v305
        %v307 = vand.u32 %v306, 4294901760
        %v308 = vsub.f32 %v306, %v307
        %v309 = vand.u32 %v308, 4294901760
        %310 = vmatpush1.msra.mxu0 %v309
        %311 = vmatprep.subr.mxu0 0.0
        %v312 = vand.u32 %v154, 4294901760
        %v313 = vsub.f32 %v154, %v312
        %v314 = vand.u32 %v313, 4294901760
        %v315 = vsub.f32 %v313, %v314
        %v316 = vand.u32 %v315, 4294901760
        %317 = vmatpush1.msra.mxu0 %v316
        %318 = vmatprep.subr.mxu0 0.0
        %v319 = vand.u32 %v153, 4294901760
        %v320 = vsub.f32 %v153, %v319
        %v321 = vand.u32 %v320, 4294901760
        %v322 = vsub.f32 %v320, %v321
        %v323 = vand.u32 %v322, 4294901760
        %324 = vmatpush1.msra.mxu0 %v323
        %325 = vmatprep.subr.mxu0 0.0
        %v326 = vand.u32 %v152, 4294901760
        %v327 = vsub.f32 %v152, %v326
        %v328 = vand.u32 %v327, 4294901760
        %v329 = vsub.f32 %v327, %v328
        %v330 = vand.u32 %v329, 4294901760
        %331 = vmatpush1.msra.mxu0 %v330
        %332 = vmatprep.subr.mxu0 0.0
        %v333 = vand.u32 %v151, 4294901760
        %v334 = vsub.f32 %v151, %v333
        %v335 = vand.u32 %v334, 4294901760
        %v336 = vsub.f32 %v334, %v335
        %v337 = vand.u32 %v336, 4294901760
        %338 = vmatpush1.msra.mxu0 %v337
        %339 = vmatprep.subr.mxu0 0.0
        %v340 = vand.u32 %v150, 4294901760
        %v341 = vsub.f32 %v150, %v340
        %v342 = vand.u32 %v341, 4294901760
        %v343 = vsub.f32 %v341, %v342
        %v344 = vand.u32 %v343, 4294901760
        %345 = vmatpush1.msra.mxu0 %v344
        %346 = vmatprep.subr.mxu0 0.0
        %v347 = vand.u32 %v149, 4294901760
        %v348 = vsub.f32 %v149, %v347
        %v349 = vand.u32 %v348, 4294901760
        %v350 = vsub.f32 %v348, %v349
        %v351 = vand.u32 %v350, 4294901760
        %352 = vmatpush1.msra.mxu0 %v351
        %353 = vmatprep.subr.mxu0 0.0
        %v354 = vand.u32 %v148, 4294901760
        %v355 = vsub.f32 %v148, %v354
        %v356 = vand.u32 %v355, 4294901760
        %v357 = vsub.f32 %v355, %v356
        %v358 = vand.u32 %v357, 4294901760
        %359 = vmatpush1.msra.mxu0 %v358
        %360 = vmatprep.subr.mxu0 0.0
        %v361 = vand.u32 %v147, 4294901760
        %v362 = vsub.f32 %v147, %v361
        %v363 = vand.u32 %v362, 4294901760
        %v364 = vsub.f32 %v362, %v363
        %v365 = vand.u32 %v364, 4294901760
        %366 = vmatpush1.msra.mxu0 %v365
        %367 = vmatprep.subr.mxu0 0.0
        %v368 = vand.u32 %v146, 4294901760
        %v369 = vsub.f32 %v146, %v368
        %v370 = vand.u32 %v369, 4294901760
        %v371 = vsub.f32 %v369, %v370
        %v372 = vand.u32 %v371, 4294901760
        %373 = vmatpush1.msra.mxu0 %v372
        %374 = vmatprep.subr.mxu0 0.0
        %v375 = vand.u32 %v145, 4294901760
        %v376 = vsub.f32 %v145, %v375
        %v377 = vand.u32 %v376, 4294901760
        %v378 = vsub.f32 %v376, %v377
        %v379 = vand.u32 %v378, 4294901760
        %380 = vmatpush1.msra.mxu0 %v379
        %381 = vmatprep.subr.mxu0 0.0
        %v382 = vand.u32 %v144, 4294901760
        %v383 = vsub.f32 %v144, %v382
        %v384 = vand.u32 %v383, 4294901760
        %v385 = vsub.f32 %v383, %v384
        %v386 = vand.u32 %v385, 4294901760
        %387 = vmatpush1.msra.mxu0 %v386
        %388 = vmatprep.subr.mxu0 0.0
        %v389 = vand.u32 %v143, 4294901760
        %v390 = vsub.f32 %v143, %v389
        %v391 = vand.u32 %v390, 4294901760
        %v392 = vsub.f32 %v390, %v391
        %v393 = vand.u32 %v392, 4294901760
        %394 = vmatpush1.msra.mxu0 %v393
        %395 = vmatprep.subr.mxu0 0.0
        %v396 = vand.u32 %v142, 4294901760
        %v397 = vsub.f32 %v142, %v396
        %v398 = vand.u32 %v397, 4294901760
        %v399 = vsub.f32 %v397, %v398
        %v400 = vand.u32 %v399, 4294901760
        %401 = vmatpush1.msra.mxu0 %v400
        %402 = vmatprep.subr.mxu0 0.0
        %v403 = vand.u32 %v173, 4294901760
        %v404 = vsub.f32 %v173, %v403
        %v405 = vand.u32 %v404, 4294901760
        %v406 = vsub.f32 %v404, %v405
        %v407 = vand.u32 %v406, 4294901760
        %408 = vmatpush2.msra.mxu0 %v407
        %409 = vmatprep.subr.mxu0 0.0
        %v410 = vand.u32 %v172, 4294901760
        %v411 = vsub.f32 %v172, %v410
        %v412 = vand.u32 %v411, 4294901760
        %v413 = vsub.f32 %v411, %v412
        %v414 = vand.u32 %v413, 4294901760
        %415 = vmatpush2.msra.mxu0 %v414
        %416 = vmatprep.subr.mxu0 0.0
        %v417 = vand.u32 %v171, 4294901760
        %v418 = vsub.f32 %v171, %v417
        %v419 = vand.u32 %v418, 4294901760
        %v420 = vsub.f32 %v418, %v419
        %v421 = vand.u32 %v420, 4294901760
        %422 = vmatpush2.msra.mxu0 %v421
        %423 = vmatprep.subr.mxu0 0.0
        %v424 = vand.u32 %v170, 4294901760
        %v425 = vsub.f32 %v170, %v424
        %v426 = vand.u32 %v425, 4294901760
        %v427 = vsub.f32 %v425, %v426
        %v428 = vand.u32 %v427, 4294901760
        %429 = vmatpush2.msra.mxu0 %v428
        %430 = vmatprep.subr.mxu0 0.0
        %v431 = vand.u32 %v169, 4294901760
        %v432 = vsub.f32 %v169, %v431
        %v433 = vand.u32 %v432, 4294901760
        %v434 = vsub.f32 %v432, %v433
        %v435 = vand.u32 %v434, 4294901760
        %436 = vmatpush2.msra.mxu0 %v435
        %437 = vmatprep.subr.mxu0 0.0
        %v438 = vand.u32 %v168, 4294901760
        %v439 = vsub.f32 %v168, %v438
        %v440 = vand.u32 %v439, 4294901760
        %v441 = vsub.f32 %v439, %v440
        %v442 = vand.u32 %v441, 4294901760
        %443 = vmatpush2.msra.mxu0 %v442
        %444 = vmatprep.subr.mxu0 0.0
        %v445 = vand.u32 %v167, 4294901760
        %v446 = vsub.f32 %v167, %v445
        %v447 = vand.u32 %v446, 4294901760
        %v448 = vsub.f32 %v446, %v447
        %v449 = vand.u32 %v448, 4294901760
        %450 = vmatpush2.msra.mxu0 %v449
        %451 = vmatprep.subr.mxu0 0.0
        %v452 = vand.u32 %v166, 4294901760
        %v453 = vsub.f32 %v166, %v452
        %v454 = vand.u32 %v453, 4294901760
        %v455 = vsub.f32 %v453, %v454
        %v456 = vand.u32 %v455, 4294901760
        %457 = vmatpush2.msra.mxu0 %v456
        %458 = vmatprep.subr.mxu0 0.0
        %v459 = vand.u32 %v165, 4294901760
        %v460 = vsub.f32 %v165, %v459
        %v461 = vand.u32 %v460, 4294901760
        %v462 = vsub.f32 %v460, %v461
        %v463 = vand.u32 %v462, 4294901760
        %464 = vmatpush2.msra.mxu0 %v463
        %465 = vmatprep.subr.mxu0 0.0
        %v466 = vand.u32 %v164, 4294901760
        %v467 = vsub.f32 %v164, %v466
        %v468 = vand.u32 %v467, 4294901760
        %v469 = vsub.f32 %v467, %v468
        %v470 = vand.u32 %v469, 4294901760
        %471 = vmatpush2.msra.mxu0 %v470
        %472 = vmatprep.subr.mxu0 0.0
        %v473 = vand.u32 %v163, 4294901760
        %v474 = vsub.f32 %v163, %v473
        %v475 = vand.u32 %v474, 4294901760
        %v476 = vsub.f32 %v474, %v475
        %v477 = vand.u32 %v476, 4294901760
        %478 = vmatpush2.msra.mxu0 %v477
        %479 = vmatprep.subr.mxu0 0.0
        %v480 = vand.u32 %v162, 4294901760
        %v481 = vsub.f32 %v162, %v480
        %v482 = vand.u32 %v481, 4294901760
        %v483 = vsub.f32 %v481, %v482
        %v484 = vand.u32 %v483, 4294901760
        %485 = vmatpush2.msra.mxu0 %v484
        %486 = vmatprep.subr.mxu0 0.0
        %v487 = vand.u32 %v161, 4294901760
        %v488 = vsub.f32 %v161, %v487
        %v489 = vand.u32 %v488, 4294901760
        %v490 = vsub.f32 %v488, %v489
        %v491 = vand.u32 %v490, 4294901760
        %492 = vmatpush2.msra.mxu0 %v491
        %493 = vmatprep.subr.mxu0 0.0
        %v494 = vand.u32 %v160, 4294901760
        %v495 = vsub.f32 %v160, %v494
        %v496 = vand.u32 %v495, 4294901760
        %v497 = vsub.f32 %v495, %v496
        %v498 = vand.u32 %v497, 4294901760
        %499 = vmatpush2.msra.mxu0 %v498
        %500 = vmatprep.subr.mxu0 0.0
        %v501 = vand.u32 %v159, 4294901760
        %v502 = vsub.f32 %v159, %v501
        %v503 = vand.u32 %v502, 4294901760
        %v504 = vsub.f32 %v502, %v503
        %v505 = vand.u32 %v504, 4294901760
        %506 = vmatpush2.msra.mxu0 %v505
        %507 = vmatprep.subr.mxu0 0.0
        %v508 = vand.u32 %v158, 4294901760
        %v509 = vsub.f32 %v158, %v508
        %v510 = vand.u32 %v509, 4294901760
        %v511 = vsub.f32 %v509, %v510
        %v512 = vand.u32 %v511, 4294901760
        %513 = vmatpush2.msra.mxu0 %v512
        %v514 = vand.u32 %v176, 4294901760
        %515 = vmatprep.mubr.f32.mxu0 %v514
        %v516 = vand.u32 %v174, 4294901760
        %517 = vmatmul.mubr.f32.gmra.mxu0 %v516
        %v518 = vpop.f32.mrf.mxu0
        %v519 = vadd.f32 %v287, %v518
        %v520 = vpop.f32.mrf.mxu0
        %521 = vdwg.mxu0
        %522 = vmatprep.subr.mxu0 0.0
        %v523 = vand.u32 %v157, 4294901760
        %v524 = vsub.f32 %v157, %v523
        %525 = vmatpush1.msra.mxu0 %v524
        %526 = vmatprep.subr.mxu0 0.0
        %v527 = vand.u32 %v156, 4294901760
        %v528 = vsub.f32 %v156, %v527
        %529 = vmatpush1.msra.mxu0 %v528
        %530 = vmatprep.subr.mxu0 0.0
        %v531 = vand.u32 %v155, 4294901760
        %v532 = vsub.f32 %v155, %v531
        %533 = vmatpush1.msra.mxu0 %v532
        %534 = vmatprep.subr.mxu0 0.0
        %v535 = vand.u32 %v154, 4294901760
        %v536 = vsub.f32 %v154, %v535
        %537 = vmatpush1.msra.mxu0 %v536
        %538 = vmatprep.subr.mxu0 0.0
        %v539 = vand.u32 %v153, 4294901760
        %v540 = vsub.f32 %v153, %v539
        %541 = vmatpush1.msra.mxu0 %v540
        %542 = vmatprep.subr.mxu0 0.0
        %v543 = vand.u32 %v152, 4294901760
        %v544 = vsub.f32 %v152, %v543
        %545 = vmatpush1.msra.mxu0 %v544
        %546 = vmatprep.subr.mxu0 0.0
        %v547 = vand.u32 %v151, 4294901760
        %v548 = vsub.f32 %v151, %v547
        %549 = vmatpush1.msra.mxu0 %v548
        %550 = vmatprep.subr.mxu0 0.0
        %v551 = vand.u32 %v150, 4294901760
        %v552 = vsub.f32 %v150, %v551
        %553 = vmatpush1.msra.mxu0 %v552
        %554 = vmatprep.subr.mxu0 0.0
        %v555 = vand.u32 %v149, 4294901760
        %v556 = vsub.f32 %v149, %v555
        %557 = vmatpush1.msra.mxu0 %v556
        %558 = vmatprep.subr.mxu0 0.0
        %v559 = vand.u32 %v148, 4294901760
        %v560 = vsub.f32 %v148, %v559
        %561 = vmatpush1.msra.mxu0 %v560
        %562 = vmatprep.subr.mxu0 0.0
        %v563 = vand.u32 %v147, 4294901760
        %v564 = vsub.f32 %v147, %v563
        %565 = vmatpush1.msra.mxu0 %v564
        %566 = vmatprep.subr.mxu0 0.0
        %v567 = vand.u32 %v146, 4294901760
        %v568 = vsub.f32 %v146, %v567
        %569 = vmatpush1.msra.mxu0 %v568
        %570 = vmatprep.subr.mxu0 0.0
        %v571 = vand.u32 %v145, 4294901760
        %v572 = vsub.f32 %v145, %v571
        %573 = vmatpush1.msra.mxu0 %v572
        %574 = vmatprep.subr.mxu0 0.0
        %v575 = vand.u32 %v144, 4294901760
        %v576 = vsub.f32 %v144, %v575
        %577 = vmatpush1.msra.mxu0 %v576
        %578 = vmatprep.subr.mxu0 0.0
        %v579 = vand.u32 %v143, 4294901760
        %v580 = vsub.f32 %v143, %v579
        %581 = vmatpush1.msra.mxu0 %v580
        %582 = vmatprep.subr.mxu0 0.0
        %v583 = vand.u32 %v142, 4294901760
        %v584 = vsub.f32 %v142, %v583
        %585 = vmatpush1.msra.mxu0 %v584
        %586 = vmatprep.subr.mxu0 0.0
        %v587 = vand.u32 %v173, 4294901760
        %v588 = vsub.f32 %v173, %v587
        %589 = vmatpush2.msra.mxu0 %v588
        %590 = vmatprep.subr.mxu0 0.0
        %v591 = vand.u32 %v172, 4294901760
        %v592 = vsub.f32 %v172, %v591
        %593 = vmatpush2.msra.mxu0 %v592
        %594 = vmatprep.subr.mxu0 0.0
        %v595 = vand.u32 %v171, 4294901760
        %v596 = vsub.f32 %v171, %v595
        %597 = vmatpush2.msra.mxu0 %v596
        %598 = vmatprep.subr.mxu0 0.0
        %v599 = vand.u32 %v170, 4294901760
        %v600 = vsub.f32 %v170, %v599
        %601 = vmatpush2.msra.mxu0 %v600
        %602 = vmatprep.subr.mxu0 0.0
        %v603 = vand.u32 %v169, 4294901760
        %v604 = vsub.f32 %v169, %v603
        %605 = vmatpush2.msra.mxu0 %v604
        %606 = vmatprep.subr.mxu0 0.0
        %v607 = vand.u32 %v168, 4294901760
        %v608 = vsub.f32 %v168, %v607
        %609 = vmatpush2.msra.mxu0 %v608
        %610 = vmatprep.subr.mxu0 0.0
        %v611 = vand.u32 %v167, 4294901760
        %v612 = vsub.f32 %v167, %v611
        %613 = vmatpush2.msra.mxu0 %v612
        %614 = vmatprep.subr.mxu0 0.0
        %v615 = vand.u32 %v166, 4294901760
        %v616 = vsub.f32 %v166, %v615
        %617 = vmatpush2.msra.mxu0 %v616
        %618 = vmatprep.subr.mxu0 0.0
        %v619 = vand.u32 %v165, 4294901760
        %v620 = vsub.f32 %v165, %v619
        %621 = vmatpush2.msra.mxu0 %v620
        %622 = vmatprep.subr.mxu0 0.0
        %v623 = vand.u32 %v164, 4294901760
        %v624 = vsub.f32 %v164, %v623
        %625 = vmatpush2.msra.mxu0 %v624
        %626 = vmatprep.subr.mxu0 0.0
        %v627 = vand.u32 %v163, 4294901760
        %v628 = vsub.f32 %v163, %v627
        %629 = vmatpush2.msra.mxu0 %v628
        %630 = vmatprep.subr.mxu0 0.0
        %v631 = vand.u32 %v162, 4294901760
        %v632 = vsub.f32 %v162, %v631
        %633 = vmatpush2.msra.mxu0 %v632
        %634 = vmatprep.subr.mxu0 0.0
        %v635 = vand.u32 %v161, 4294901760
        %v636 = vsub.f32 %v161, %v635
        %637 = vmatpush2.msra.mxu0 %v636
        %638 = vmatprep.subr.mxu0 0.0
        %v639 = vand.u32 %v160, 4294901760
        %v640 = vsub.f32 %v160, %v639
        %641 = vmatpush2.msra.mxu0 %v640
        %642 = vmatprep.subr.mxu0 0.0
        %v643 = vand.u32 %v159, 4294901760
        %v644 = vsub.f32 %v159, %v643
        %645 = vmatpush2.msra.mxu0 %v644
        %646 = vmatprep.subr.mxu0 0.0
        %v647 = vand.u32 %v158, 4294901760
        %v648 = vsub.f32 %v158, %v647
        %649 = vmatpush2.msra.mxu0 %v648
        %v650 = vand.u32 %v176, 4294901760
        %v651 = vsub.f32 %v176, %v650
        %652 = vmatprep.mubr.f32.mxu0 %v651
        %v653 = vand.u32 %v174, 4294901760
        %v654 = vsub.f32 %v174, %v653
        %655 = vmatmul.mubr.f32.gmra.mxu0 %v654
        %v656 = vpop.f32.mrf.mxu0
        %v657 = vadd.f32 %v519, %v656
        %v658 = vpop.f32.mrf.mxu0
        %659 = vdwg.mxu0
        %660 = vmatprep.subr.mxu0 0.0
        %v661 = vand.u32 %v157, 4294901760
        %662 = vmatpush1.msra.mxu0 %v661
        %663 = vmatprep.subr.mxu0 0.0
        %v664 = vand.u32 %v156, 4294901760
        %665 = vmatpush1.msra.mxu0 %v664
        %666 = vmatprep.subr.mxu0 0.0
        %v667 = vand.u32 %v155, 4294901760
        %668 = vmatpush1.msra.mxu0 %v667
        %669 = vmatprep.subr.mxu0 0.0
        %v670 = vand.u32 %v154, 4294901760
        %671 = vmatpush1.msra.mxu0 %v670
        %672 = vmatprep.subr.mxu0 0.0
        %v673 = vand.u32 %v153, 4294901760
        %674 = vmatpush1.msra.mxu0 %v673
        %675 = vmatprep.subr.mxu0 0.0
        %v676 = vand.u32 %v152, 4294901760
        %677 = vmatpush1.msra.mxu0 %v676
        %678 = vmatprep.subr.mxu0 0.0
        %v679 = vand.u32 %v151, 4294901760
        %680 = vmatpush1.msra.mxu0 %v679
        %681 = vmatprep.subr.mxu0 0.0
        %v682 = vand.u32 %v150, 4294901760
        %683 = vmatpush1.msra.mxu0 %v682
        %684 = vmatprep.subr.mxu0 0.0
        %v685 = vand.u32 %v149, 4294901760
        %686 = vmatpush1.msra.mxu0 %v685
        %687 = vmatprep.subr.mxu0 0.0
        %v688 = vand.u32 %v148, 4294901760
        %689 = vmatpush1.msra.mxu0 %v688
        %690 = vmatprep.subr.mxu0 0.0
        %v691 = vand.u32 %v147, 4294901760
        %692 = vmatpush1.msra.mxu0 %v691
        %693 = vmatprep.subr.mxu0 0.0
        %v694 = vand.u32 %v146, 4294901760
        %695 = vmatpush1.msra.mxu0 %v694
        %696 = vmatprep.subr.mxu0 0.0
        %v697 = vand.u32 %v145, 4294901760
        %698 = vmatpush1.msra.mxu0 %v697
        %699 = vmatprep.subr.mxu0 0.0
        %v700 = vand.u32 %v144, 4294901760
        %701 = vmatpush1.msra.mxu0 %v700
        %702 = vmatprep.subr.mxu0 0.0
        %v703 = vand.u32 %v143, 4294901760
        %704 = vmatpush1.msra.mxu0 %v703
        %705 = vmatprep.subr.mxu0 0.0
        %v706 = vand.u32 %v142, 4294901760
        %707 = vmatpush1.msra.mxu0 %v706
        %708 = vmatprep.subr.mxu0 0.0
        %v709 = vand.u32 %v173, 4294901760
        %710 = vmatpush2.msra.mxu0 %v709
        %711 = vmatprep.subr.mxu0 0.0
        %v712 = vand.u32 %v172, 4294901760
        %713 = vmatpush2.msra.mxu0 %v712
        %714 = vmatprep.subr.mxu0 0.0
        %v715 = vand.u32 %v171, 4294901760
        %716 = vmatpush2.msra.mxu0 %v715
        %717 = vmatprep.subr.mxu0 0.0
        %v718 = vand.u32 %v170, 4294901760
        %719 = vmatpush2.msra.mxu0 %v718
        %720 = vmatprep.subr.mxu0 0.0
        %v721 = vand.u32 %v169, 4294901760
        %722 = vmatpush2.msra.mxu0 %v721
        %723 = vmatprep.subr.mxu0 0.0
        %v724 = vand.u32 %v168, 4294901760
        %725 = vmatpush2.msra.mxu0 %v724
        %726 = vmatprep.subr.mxu0 0.0
        %v727 = vand.u32 %v167, 4294901760
        %728 = vmatpush2.msra.mxu0 %v727
        %729 = vmatprep.subr.mxu0 0.0
        %v730 = vand.u32 %v166, 4294901760
        %731 = vmatpush2.msra.mxu0 %v730
        %732 = vmatprep.subr.mxu0 0.0
        %v733 = vand.u32 %v165, 4294901760
        %734 = vmatpush2.msra.mxu0 %v733
        %735 = vmatprep.subr.mxu0 0.0
        %v736 = vand.u32 %v164, 4294901760
        %737 = vmatpush2.msra.mxu0 %v736
        %738 = vmatprep.subr.mxu0 0.0
        %v739 = vand.u32 %v163, 4294901760
        %740 = vmatpush2.msra.mxu0 %v739
        %741 = vmatprep.subr.mxu0 0.0
        %v742 = vand.u32 %v162, 4294901760
        %743 = vmatpush2.msra.mxu0 %v742
        %744 = vmatprep.subr.mxu0 0.0
        %v745 = vand.u32 %v161, 4294901760
        %746 = vmatpush2.msra.mxu0 %v745
        %747 = vmatprep.subr.mxu0 0.0
        %v748 = vand.u32 %v160, 4294901760
        %749 = vmatpush2.msra.mxu0 %v748
        %750 = vmatprep.subr.mxu0 0.0
        %v751 = vand.u32 %v159, 4294901760
        %752 = vmatpush2.msra.mxu0 %v751
        %753 = vmatprep.subr.mxu0 0.0
        %v754 = vand.u32 %v158, 4294901760
        %755 = vmatpush2.msra.mxu0 %v754
        %v756 = vand.u32 %v176, 4294901760
        %v757 = vsub.f32 %v176, %v756
        %v758 = vand.u32 %v757, 4294901760
        %759 = vmatprep.mubr.f32.mxu0 %v758
        %v760 = vand.u32 %v174, 4294901760
        %v761 = vsub.f32 %v174, %v760
        %v762 = vand.u32 %v761, 4294901760
        %763 = vmatmul.mubr.f32.gmra.mxu0 %v762
        %v764 = vpop.f32.mrf.mxu0
        %v765 = vadd.f32 %v657, %v764
        %v766 = vpop.f32.mrf.mxu0
        %767 = vdwg.mxu0
        %768 = vmatprep.subr.mxu0 0.0
        %v769 = vand.u32 %v157, 4294901760
        %v770 = vsub.f32 %v157, %v769
        %v771 = vand.u32 %v770, 4294901760
        %772 = vmatpush1.msra.mxu0 %v771
        %773 = vmatprep.subr.mxu0 0.0
        %v774 = vand.u32 %v156, 4294901760
        %v775 = vsub.f32 %v156, %v774
        %v776 = vand.u32 %v775, 4294901760
        %777 = vmatpush1.msra.mxu0 %v776
        %778 = vmatprep.subr.mxu0 0.0
        %v779 = vand.u32 %v155, 4294901760
        %v780 = vsub.f32 %v155, %v779
        %v781 = vand.u32 %v780, 4294901760
        %782 = vmatpush1.msra.mxu0 %v781
        %783 = vmatprep.subr.mxu0 0.0
        %v784 = vand.u32 %v154, 4294901760
        %v785 = vsub.f32 %v154, %v784
        %v786 = vand.u32 %v785, 4294901760
        %787 = vmatpush1.msra.mxu0 %v786
        %788 = vmatprep.subr.mxu0 0.0
        %v789 = vand.u32 %v153, 4294901760
        %v790 = vsub.f32 %v153, %v789
        %v791 = vand.u32 %v790, 4294901760
        %792 = vmatpush1.msra.mxu0 %v791
        %793 = vmatprep.subr.mxu0 0.0
        %v794 = vand.u32 %v152, 4294901760
        %v795 = vsub.f32 %v152, %v794
        %v796 = vand.u32 %v795, 4294901760
        %797 = vmatpush1.msra.mxu0 %v796
        %798 = vmatprep.subr.mxu0 0.0
        %v799 = vand.u32 %v151, 4294901760
        %v800 = vsub.f32 %v151, %v799
        %v801 = vand.u32 %v800, 4294901760
        %802 = vmatpush1.msra.mxu0 %v801
        %803 = vmatprep.subr.mxu0 0.0
        %v804 = vand.u32 %v150, 4294901760
        %v805 = vsub.f32 %v150, %v804
        %v806 = vand.u32 %v805, 4294901760
        %807 = vmatpush1.msra.mxu0 %v806
        %808 = vmatprep.subr.mxu0 0.0
        %v809 = vand.u32 %v149, 4294901760
        %v810 = vsub.f32 %v149, %v809
        %v811 = vand.u32 %v810, 4294901760
        %812 = vmatpush1.msra.mxu0 %v811
        %813 = vmatprep.subr.mxu0 0.0
        %v814 = vand.u32 %v148, 4294901760
        %v815 = vsub.f32 %v148, %v814
        %v816 = vand.u32 %v815, 4294901760
        %817 = vmatpush1.msra.mxu0 %v816
        %818 = vmatprep.subr.mxu0 0.0
        %v819 = vand.u32 %v147, 4294901760
        %v820 = vsub.f32 %v147, %v819
        %v821 = vand.u32 %v820, 4294901760
        %822 = vmatpush1.msra.mxu0 %v821
        %823 = vmatprep.subr.mxu0 0.0
        %v824 = vand.u32 %v146, 4294901760
        %v825 = vsub.f32 %v146, %v824
        %v826 = vand.u32 %v825, 4294901760
        %827 = vmatpush1.msra.mxu0 %v826
        %828 = vmatprep.subr.mxu0 0.0
        %v829 = vand.u32 %v145, 4294901760
        %v830 = vsub.f32 %v145, %v829
        %v831 = vand.u32 %v830, 4294901760
        %832 = vmatpush1.msra.mxu0 %v831
        %833 = vmatprep.subr.mxu0 0.0
        %v834 = vand.u32 %v144, 4294901760
        %v835 = vsub.f32 %v144, %v834
        %v836 = vand.u32 %v835, 4294901760
        %837 = vmatpush1.msra.mxu0 %v836
        %838 = vmatprep.subr.mxu0 0.0
        %v839 = vand.u32 %v143, 4294901760
        %v840 = vsub.f32 %v143, %v839
        %v841 = vand.u32 %v840, 4294901760
        %842 = vmatpush1.msra.mxu0 %v841
        %843 = vmatprep.subr.mxu0 0.0
        %v844 = vand.u32 %v142, 4294901760
        %v845 = vsub.f32 %v142, %v844
        %v846 = vand.u32 %v845, 4294901760
        %847 = vmatpush1.msra.mxu0 %v846
        %848 = vmatprep.subr.mxu0 0.0
        %v849 = vand.u32 %v173, 4294901760
        %v850 = vsub.f32 %v173, %v849
        %v851 = vand.u32 %v850, 4294901760
        %852 = vmatpush2.msra.mxu0 %v851
        %853 = vmatprep.subr.mxu0 0.0
        %v854 = vand.u32 %v172, 4294901760
        %v855 = vsub.f32 %v172, %v854
        %v856 = vand.u32 %v855, 4294901760
        %857 = vmatpush2.msra.mxu0 %v856
        %858 = vmatprep.subr.mxu0 0.0
        %v859 = vand.u32 %v171, 4294901760
        %v860 = vsub.f32 %v171, %v859
        %v861 = vand.u32 %v860, 4294901760
        %862 = vmatpush2.msra.mxu0 %v861
        %863 = vmatprep.subr.mxu0 0.0
        %v864 = vand.u32 %v170, 4294901760
        %v865 = vsub.f32 %v170, %v864
        %v866 = vand.u32 %v865, 4294901760
        %867 = vmatpush2.msra.mxu0 %v866
        %868 = vmatprep.subr.mxu0 0.0
        %v869 = vand.u32 %v169, 4294901760
        %v870 = vsub.f32 %v169, %v869
        %v871 = vand.u32 %v870, 4294901760
        %872 = vmatpush2.msra.mxu0 %v871
        %873 = vmatprep.subr.mxu0 0.0
        %v874 = vand.u32 %v168, 4294901760
        %v875 = vsub.f32 %v168, %v874
        %v876 = vand.u32 %v875, 4294901760
        %877 = vmatpush2.msra.mxu0 %v876
        %878 = vmatprep.subr.mxu0 0.0
        %v879 = vand.u32 %v167, 4294901760
        %v880 = vsub.f32 %v167, %v879
        %v881 = vand.u32 %v880, 4294901760
        %882 = vmatpush2.msra.mxu0 %v881
        %883 = vmatprep.subr.mxu0 0.0
        %v884 = vand.u32 %v166, 4294901760
        %v885 = vsub.f32 %v166, %v884
        %v886 = vand.u32 %v885, 4294901760
        %887 = vmatpush2.msra.mxu0 %v886
        %888 = vmatprep.subr.mxu0 0.0
        %v889 = vand.u32 %v165, 4294901760
        %v890 = vsub.f32 %v165, %v889
        %v891 = vand.u32 %v890, 4294901760
        %892 = vmatpush2.msra.mxu0 %v891
        %893 = vmatprep.subr.mxu0 0.0
        %v894 = vand.u32 %v164, 4294901760
        %v895 = vsub.f32 %v164, %v894
        %v896 = vand.u32 %v895, 4294901760
        %897 = vmatpush2.msra.mxu0 %v896
        %898 = vmatprep.subr.mxu0 0.0
        %v899 = vand.u32 %v163, 4294901760
        %v900 = vsub.f32 %v163, %v899
        %v901 = vand.u32 %v900, 4294901760
        %902 = vmatpush2.msra.mxu0 %v901
        %903 = vmatprep.subr.mxu0 0.0
        %v904 = vand.u32 %v162, 4294901760
        %v905 = vsub.f32 %v162, %v904
        %v906 = vand.u32 %v905, 4294901760
        %907 = vmatpush2.msra.mxu0 %v906
        %908 = vmatprep.subr.mxu0 0.0
        %v909 = vand.u32 %v161, 4294901760
        %v910 = vsub.f32 %v161, %v909
        %v911 = vand.u32 %v910, 4294901760
        %912 = vmatpush2.msra.mxu0 %v911
        %913 = vmatprep.subr.mxu0 0.0
        %v914 = vand.u32 %v160, 4294901760
        %v915 = vsub.f32 %v160, %v914
        %v916 = vand.u32 %v915, 4294901760
        %917 = vmatpush2.msra.mxu0 %v916
        %918 = vmatprep.subr.mxu0 0.0
        %v919 = vand.u32 %v159, 4294901760
        %v920 = vsub.f32 %v159, %v919
        %v921 = vand.u32 %v920, 4294901760
        %922 = vmatpush2.msra.mxu0 %v921
        %923 = vmatprep.subr.mxu0 0.0
        %v924 = vand.u32 %v158, 4294901760
        %v925 = vsub.f32 %v158, %v924
        %v926 = vand.u32 %v925, 4294901760
        %927 = vmatpush2.msra.mxu0 %v926
        %v928 = vand.u32 %v176, 4294901760
        %929 = vmatprep.mubr.f32.mxu0 %v928
        %v930 = vand.u32 %v174, 4294901760
        %931 = vmatmul.mubr.f32.gmra.mxu0 %v930
        %v932 = vpop.f32.mrf.mxu0
        %v933 = vadd.f32 %v765, %v932
        %v934 = vpop.f32.mrf.mxu0
        %935 = vdwg.mxu0
        %936 = vmatprep.subr.mxu0 0.0
        %v937 = vand.u32 %v157, 4294901760
        %938 = vmatpush1.msra.mxu0 %v937
        %939 = vmatprep.subr.mxu0 0.0
        %v940 = vand.u32 %v156, 4294901760
        %941 = vmatpush1.msra.mxu0 %v940
        %942 = vmatprep.subr.mxu0 0.0
        %v943 = vand.u32 %v155, 4294901760
        %944 = vmatpush1.msra.mxu0 %v943
        %945 = vmatprep.subr.mxu0 0.0
        %v946 = vand.u32 %v154, 4294901760
        %947 = vmatpush1.msra.mxu0 %v946
        %948 = vmatprep.subr.mxu0 0.0
        %v949 = vand.u32 %v153, 4294901760
        %950 = vmatpush1.msra.mxu0 %v949
        %951 = vmatprep.subr.mxu0 0.0
        %v952 = vand.u32 %v152, 4294901760
        %953 = vmatpush1.msra.mxu0 %v952
        %954 = vmatprep.subr.mxu0 0.0
        %v955 = vand.u32 %v151, 4294901760
        %956 = vmatpush1.msra.mxu0 %v955
        %957 = vmatprep.subr.mxu0 0.0
        %v958 = vand.u32 %v150, 4294901760
        %959 = vmatpush1.msra.mxu0 %v958
        %960 = vmatprep.subr.mxu0 0.0
        %v961 = vand.u32 %v149, 4294901760
        %962 = vmatpush1.msra.mxu0 %v961
        %963 = vmatprep.subr.mxu0 0.0
        %v964 = vand.u32 %v148, 4294901760
        %965 = vmatpush1.msra.mxu0 %v964
        %966 = vmatprep.subr.mxu0 0.0
        %v967 = vand.u32 %v147, 4294901760
        %968 = vmatpush1.msra.mxu0 %v967
        %969 = vmatprep.subr.mxu0 0.0
        %v970 = vand.u32 %v146, 4294901760
        %971 = vmatpush1.msra.mxu0 %v970
        %972 = vmatprep.subr.mxu0 0.0
        %v973 = vand.u32 %v145, 4294901760
        %974 = vmatpush1.msra.mxu0 %v973
        %975 = vmatprep.subr.mxu0 0.0
        %v976 = vand.u32 %v144, 4294901760
        %977 = vmatpush1.msra.mxu0 %v976
        %978 = vmatprep.subr.mxu0 0.0
        %v979 = vand.u32 %v143, 4294901760
        %980 = vmatpush1.msra.mxu0 %v979
        %981 = vmatprep.subr.mxu0 0.0
        %v982 = vand.u32 %v142, 4294901760
        %983 = vmatpush1.msra.mxu0 %v982
        %984 = vmatprep.subr.mxu0 0.0
        %v985 = vand.u32 %v173, 4294901760
        %986 = vmatpush2.msra.mxu0 %v985
        %987 = vmatprep.subr.mxu0 0.0
        %v988 = vand.u32 %v172, 4294901760
        %989 = vmatpush2.msra.mxu0 %v988
        %990 = vmatprep.subr.mxu0 0.0
        %v991 = vand.u32 %v171, 4294901760
        %992 = vmatpush2.msra.mxu0 %v991
        %993 = vmatprep.subr.mxu0 0.0
        %v994 = vand.u32 %v170, 4294901760
        %995 = vmatpush2.msra.mxu0 %v994
        %996 = vmatprep.subr.mxu0 0.0
        %v997 = vand.u32 %v169, 4294901760
        %998 = vmatpush2.msra.mxu0 %v997
        %999 = vmatprep.subr.mxu0 0.0
        %v1000 = vand.u32 %v168, 4294901760
        %1001 = vmatpush2.msra.mxu0 %v1000
        %1002 = vmatprep.subr.mxu0 0.0
        %v1003 = vand.u32 %v167, 4294901760
        %1004 = vmatpush2.msra.mxu0 %v1003
        %1005 = vmatprep.subr.mxu0 0.0
        %v1006 = vand.u32 %v166, 4294901760
        %1007 = vmatpush2.msra.mxu0 %v1006
        %1008 = vmatprep.subr.mxu0 0.0
        %v1009 = vand.u32 %v165, 4294901760
        %1010 = vmatpush2.msra.mxu0 %v1009
        %1011 = vmatprep.subr.mxu0 0.0
        %v1012 = vand.u32 %v164, 4294901760
        %1013 = vmatpush2.msra.mxu0 %v1012
        %1014 = vmatprep.subr.mxu0 0.0
        %v1015 = vand.u32 %v163, 4294901760
        %1016 = vmatpush2.msra.mxu0 %v1015
        %1017 = vmatprep.subr.mxu0 0.0
        %v1018 = vand.u32 %v162, 4294901760
        %1019 = vmatpush2.msra.mxu0 %v1018
        %1020 = vmatprep.subr.mxu0 0.0
        %v1021 = vand.u32 %v161, 4294901760
        %1022 = vmatpush2.msra.mxu0 %v1021
        %1023 = vmatprep.subr.mxu0 0.0
        %v1024 = vand.u32 %v160, 4294901760
        %1025 = vmatpush2.msra.mxu0 %v1024
        %1026 = vmatprep.subr.mxu0 0.0
        %v1027 = vand.u32 %v159, 4294901760
        %1028 = vmatpush2.msra.mxu0 %v1027
        %1029 = vmatprep.subr.mxu0 0.0
        %v1030 = vand.u32 %v158, 4294901760
        %1031 = vmatpush2.msra.mxu0 %v1030
        %v1032 = vand.u32 %v176, 4294901760
        %1033 = vmatprep.mubr.f32.mxu0 %v1032
        %v1034 = vand.u32 %v174, 4294901760
        %1035 = vmatmul.mubr.f32.gmra.mxu0 %v1034
        %v1036 = vpop.f32.mrf.mxu0
        %v1037 = vadd.f32 %v933, %v1036
        %v1038 = vpop.f32.mrf.mxu0
        %1039 = vdwg.mxu0
        %vm1040 = vcmask 517120
        %1041 = vst.msk [vmem:[%s136] sm:$0x3] %vm1040, 0.0
        %vm1042 = vcmask 519168
        %1043 = vst.msk [vmem:[%s136 + $0x2] sm:$0xf] %vm1042, %v1037
        %1044 = vst.msk [vmem:[%s136 + $0x6] sm:$0x3] %vm1040, 0.0
        %s1045 = sand.u32 %s71, 1
        %s1046 = scalar_lea.sflag [#allocation3], %s1045
        %s1047 = sand.u32 %s71, 1
        %s1048 = smul.addr %s1047, 8
        %s1049 = scalar_lea.vmem [#allocation2], %s1048
        // Predicated region
        $region29: #{tpu_custom_call.1} parent=27 // pred_check
          %p1050 = pneg %p81
        $region30: #{tpu_custom_call.1} parent=27 // pred_check_branch
          %1052 = sbr.rel (%p1050) target = $region32
        $region31: #{tpu_custom_call.1} parent=27 // pred_region
          %s1054 = ssub.s32 128, 128
          %1055 = vsyncadd %s1046, %s1054
          %s1056 = smul.addr %s16, 128
          %s1057 = scalar_lea.hbm %s2, %s1056
          %s1059 = sshll.u32 %s1049, 4
          %s1060 = int_to_ptr.vmem [resolvable:$true] %s1059
          %1062 = dma.vmem_to_hbm [thread:$0]  %s1060, 128, %s1057, %s1046
        $region32: #{tpu_custom_call.1} parent=27 // pred_fallthru
          _
      $region28: #{tpu_custom_call.1} parent=5 // pred_fallthru
        _
      %p1063 = scmp.le.s32.totalorder 2, %s11
      // Predicated region
      $region33: #{tpu_custom_call.1} parent=5 // pred_check
        %p1064 = pneg %p1063
      $region34: #{tpu_custom_call.1} parent=5 // pred_check_branch
        %1066 = sbr.rel (%p1064) target = $region36
      $region35: #{tpu_custom_call.1} parent=5 // pred_region
        %s1067 = ssub.s32 %s11, 2
        // Predicated region
        $region37: #{tpu_custom_call.1} parent=35 // pred_check
          %p1068 = pneg %p87
        $region38: #{tpu_custom_call.1} parent=35 // pred_check_branch
          %1070 = sbr.rel (%p1068) target = $region40
        $region39: #{tpu_custom_call.1} parent=35 // pred_region
          %s1071 = sand.u32 %s72, 1
          %s1072 = scalar_lea.sflag [#allocation3], %s1071
          %s1073 = sand.u32 %s72, 1
          %s1074 = smul.addr %s1073, 8
          %s1075 = scalar_lea.vmem [#allocation2], %s1074
          %1076 = dma.done %s1072, 128
        $region40: #{tpu_custom_call.1} parent=35 // pred_fallthru
          _
      $region36: #{tpu_custom_call.1} parent=5 // pred_fallthru
        _
    $region6: #{tpu_custom_call.1} parent=1 // loop_footer
      %s15 = sadd.s32 1, %s11
    $region7: #{tpu_custom_call.1} parent=1 // loop_footer_branch
      %10 = sbr.rel target = $region3
    $region8: #{tpu_custom_call.1} parent=1 // loop_exit
      _
    %1077 = vsyncpa [#allocation3], 1
    %s1078 = scalar_lea.sflag [#allocation3], 1
    %1079 = vsyncpa %s1078, 1

</llo_original>
